<compile_context>
chip_gen: v7x
topology: tpu7x:2x2x1
jax: 0.10.0
libtpu: 0.0.40
codegen_flags: <defaults>
</compile_context>

<pallas_src>
import jax
import jax.numpy as jnp
from jax.experimental import pallas as pl
from jax.experimental.pallas import tpu as pltpu

NEG_SLOPE = 0.01  # F.leaky_relu default
HIDDEN = 256


def _round_up(x, m):
    return (x + m - 1) // m * m


def _lrelu(x):
    return jnp.where(x > 0, x, NEG_SLOPE * x)


def qnetwork_kernel(x_ref, w1_ref, b1_ref, w2_ref, b2_ref, w3_ref, b3_ref,
                    out_ref):
    # Layer 1 (packed block-diagonal obs/act layer): (TB, F) @ (F, 512) on MXU,
    # f32 accumulation, bias + leaky_relu in f32.
    x = x_ref[...]                                   # bf16 (TB, obs_dim+act_dim)
    h1 = _lrelu(
        jnp.dot(x, w1_ref[...], preferred_element_type=jnp.float32)
        + b1_ref[...])                               # f32 (TB, 512)

    # Layer 2: (TB, 512) @ (512, 256). The concat([obs_h, act_h]) is already
    # baked into the 512-wide contraction axis — no slicing/concat needed.
    h2 = _lrelu(
        jnp.dot(h1.astype(jnp.bfloat16), w2_ref[...],
                preferred_element_type=jnp.float32)
        + b2_ref[...])                               # f32 (TB, 256)

    # Head (256 -> 1): an N=1 matmul wastes 127/128 MXU output columns, so do a
    # VPU multiply + XLU row-reduction instead (w3 is a (1, 256) f32 row).
    q = jnp.sum(h2 * w3_ref[...], axis=-1, keepdims=True) + b3_ref[...]
    # (TB, 1) output => masked vst; negligible bytes at this head width.
    out_ref[...] = _lrelu(q).astype(out_ref.dtype)


def qnetwork_forward(obs, act, params, *, tile_b=1024):
    """obs: (B, obs_dim) f32, act: (B, act_dim) f32 -> (B, 1) f32."""
    assert tile_b % 8 == 0
    B = obs.shape[0]

    # Fuse the concat into the wrapper; matmul operands travel as bf16.
    x = jnp.concatenate([obs, act], axis=-1).astype(jnp.bfloat16)
    feat = x.shape[1]

    tb = min(tile_b, _round_up(B, 8))       # batch tile (multiple of 8)
    bp = _round_up(B, tb)                   # padded batch
    if bp != B:
        x = jnp.pad(x, ((0, bp - B), (0, 0)))
    grid = (bp // tb,)

    w1, b1 = params["w1"], params["b1"]
    w2, b2 = params["w2"], params["b2"]
    w3, b3 = params["w3"], params["b3"]

    weight_spec = lambda a: pl.BlockSpec(a.shape, lambda i: (0, 0))

    out = pl.pallas_call(
        qnetwork_kernel,
        out_shape=jax.ShapeDtypeStruct((bp, 1), jnp.float32),
        grid=grid,
        in_specs=[
            pl.BlockSpec((tb, feat), lambda i: (i, 0)),   # activations: batch-tiled
            weight_spec(w1), weight_spec(b1),             # weights/biases: VMEM-resident
            weight_spec(w2), weight_spec(b2),
            weight_spec(w3), weight_spec(b3),
        ],
        out_specs=pl.BlockSpec((tb, 1), lambda i: (i, 0)),
        compiler_params=pltpu.CompilerParams(
            dimension_semantics=("parallel",)),           # megacore sharding on v7x
    )(x, w1, b1, w2, b2, w3, b3)
    return out[:B]


def init_params(key, obs_dim, act_dim):
    """Deterministic synthetic init (uniform, roughly torch Linear scale).

    Weights stored as (in_features, out_features)."""
    ks = jax.random.split(key, 8)

    def lin(kw, kb, fan_in, fan_out):
        bound = 1.0 / jnp.sqrt(jnp.float32(fan_in))
        w = jax.random.uniform(kw, (fan_in, fan_out), jnp.float32,
                               minval=-bound, maxval=bound)
        b = jax.random.uniform(kb, (1, fan_out), jnp.float32,
                               minval=-bound, maxval=bound)
        return w, b

    w_obs, b_obs = lin(ks[0], ks[1], obs_dim, HIDDEN)
    w_act, b_act = lin(ks[2], ks[3], act_dim, HIDDEN)
    w2, b2 = lin(ks[4], ks[5], 2 * HIDDEN, HIDDEN)
    w3, b3 = lin(ks[6], ks[7], HIDDEN, 1)
    return dict(w_obs=w_obs, b_obs=b_obs, w_act=w_act, b_act=b_act,
                w2=w2, b2=b2, w3=w3, b3=b3)


def pack_params(raw):
    """Build the kernel's packed parameter set:
       W1 = block_diag(w_obs, w_act) (bf16), b1 = [b_obs | b_act] (f32),
       W2 bf16, w3 as a (1, 256) f32 row, biases f32."""
    obs_dim = raw["w_obs"].shape[0]
    act_dim = raw["w_act"].shape[0]
    w1 = jnp.zeros((obs_dim + act_dim, 2 * HIDDEN), jnp.float32)
    w1 = w1.at[:obs_dim, :HIDDEN].set(raw["w_obs"])
    w1 = w1.at[obs_dim:, HIDDEN:].set(raw["w_act"])
    b1 = jnp.concatenate([raw["b_obs"], raw["b_act"]], axis=-1)
    return dict(
        w1=w1.astype(jnp.bfloat16),
        b1=b1,
        w2=raw["w2"].astype(jnp.bfloat16),
        b2=raw["b2"],
        w3=raw["w3"].reshape(1, HIDDEN),
        b3=raw["b3"].reshape(1, 1),
    )


def reference_forward_f32(obs, act, p):
    """Pure-f32 reference with the original torch structure (concat + slices)."""
    obs_h = jax.nn.leaky_relu(obs @ p["w_obs"] + p["b_obs"], NEG_SLOPE)
    act_h = jax.nn.leaky_relu(act @ p["w_act"] + p["b_act"], NEG_SLOPE)
    cat = jnp.concatenate([obs_h, act_h], axis=-1)
    h2 = jax.nn.leaky_relu(cat @ p["w2"] + p["b2"], NEG_SLOPE)
    return jax.nn.leaky_relu(h2 @ p["w3"] + p["b3"], NEG_SLOPE)


def reference_forward_packed(obs, act, pk):
    """Mirrors the kernel numerics (bf16 matmul operands, f32 accumulation)."""
    x = jnp.concatenate([obs, act], axis=-1).astype(jnp.bfloat16)
    h1 = jax.nn.leaky_relu(
        jnp.dot(x, pk["w1"], preferred_element_type=jnp.float32) + pk["b1"],
        NEG_SLOPE)
    h2 = jax.nn.leaky_relu(
        jnp.dot(h1.astype(jnp.bfloat16), pk["w2"],
                preferred_element_type=jnp.float32) + pk["b2"],
        NEG_SLOPE)
    q = jnp.sum(h2 * pk["w3"], axis=-1, keepdims=True) + pk["b3"]
    return jax.nn.leaky_relu(q, NEG_SLOPE)


if __name__ == "__main__":
    key = jax.random.PRNGKey(0)
    k_obs, k_act, k_param, k_obs2, k_act2 = jax.random.split(key, 5)

    obs_dim = 8   # LunarLander observation size
    act_dim = 2   # continuous LunarLander action size

    raw = init_params(k_param, obs_dim, act_dim)
    packed = pack_params(raw)

    # Case 1: small batch, single grid step.
    B = 8
    obs = jax.random.normal(k_obs, (B, obs_dim), jnp.float32)
    act = jax.random.normal(k_act, (B, act_dim), jnp.float32)
    out = jax.block_until_ready(qnetwork_forward(obs, act, packed))
    assert out.shape == (B, 1)
    assert jnp.allclose(out, reference_forward_packed(obs, act, packed),
                        atol=1e-4, rtol=1e-4)
    assert jnp.allclose(out, reference_forward_f32(obs, act, raw),
                        atol=5e-2, rtol=5e-2)  # bf16-weight quantization slack

    # Case 2: multi-tile batch grid (B=60, tile_b=16 -> grid=(4,), padded to 64).
    B2 = 60
    obs2 = jax.random.normal(k_obs2, (B2, obs_dim), jnp.float32)
    act2 = jax.random.normal(k_act2, (B2, act_dim), jnp.float32)
    out2 = jax.block_until_ready(qnetwork_forward(obs2, act2, packed, tile_b=16))
    assert out2.shape == (B2, 1)
    assert jnp.allclose(out2, reference_forward_packed(obs2, act2, packed),
                        atol=1e-4, rtol=1e-4)

    print("KERNEL_OK")
</pallas_src>

<mosaic_0001>
module attributes {stable_mosaic.version = 11 : i64} {
  func.func @qnetwork_kernel(%arg0: i32, %arg1: memref<8x10xbf16, #tpu.memory_space<vmem>>, %arg2: memref<10x512xbf16, #tpu.memory_space<vmem>>, %arg3: memref<1x512xf32, #tpu.memory_space<vmem>>, %arg4: memref<512x256xbf16, #tpu.memory_space<vmem>>, %arg5: memref<1x256xf32, #tpu.memory_space<vmem>>, %arg6: memref<1x256xf32, #tpu.memory_space<vmem>>, %arg7: memref<1x1xf32, #tpu.memory_space<vmem>>, %arg8: memref<8x1xf32, #tpu.memory_space<vmem>>) attributes {dimension_semantics = [#tpu.dimension_semantics<parallel>], iteration_bounds = array<i64: 1>, scalar_prefetch = 0 : i64, scratch_operands = 0 : i64, tpu.core_type = #tpu.core_type<tc>, window_params = [{transform_indices = @transform_0, window_bounds = array<i64: 8, 10>}, {pipeline_mode = #tpu.pipeline_mode<synchronous>, transform_indices = @transform_1, window_bounds = array<i64: 10, 512>}, {pipeline_mode = #tpu.pipeline_mode<synchronous>, transform_indices = @transform_2, window_bounds = array<i64: 1, 512>}, {pipeline_mode = #tpu.pipeline_mode<synchronous>, transform_indices = @transform_3, window_bounds = array<i64: 512, 256>}, {pipeline_mode = #tpu.pipeline_mode<synchronous>, transform_indices = @transform_4, window_bounds = array<i64: 1, 256>}, {pipeline_mode = #tpu.pipeline_mode<synchronous>, transform_indices = @transform_5, window_bounds = array<i64: 1, 256>}, {pipeline_mode = #tpu.pipeline_mode<synchronous>, transform_indices = @transform_6, window_bounds = array<i64: 1, 1>}, {transform_indices = @transform_7, window_bounds = array<i64: 8, 1>}]} {
    %c0 = arith.constant 0 : index
    %c0_0 = arith.constant 0 : index
    %0 = vector.load %arg1[%c0, %c0_0] : memref<8x10xbf16, #tpu.memory_space<vmem>>, vector<8x10xbf16>
    %c0_1 = arith.constant 0 : index
    %c0_2 = arith.constant 0 : index
    %1 = vector.load %arg2[%c0_1, %c0_2] : memref<10x512xbf16, #tpu.memory_space<vmem>>, vector<10x512xbf16>
    %cst = arith.constant dense<0.000000e+00> : vector<8x512xf32>
    %2 = tpu.matmul %0, %1, %cst {dimension_numbers = #tpu.dot_dimension_numbers<[1], [0], [0], [1], [0, 0, 1, 1], [], []>} : vector<8x10xbf16>, vector<10x512xbf16>, vector<8x512xf32> -> vector<8x512xf32>
    %c0_3 = arith.constant 0 : index
    %c0_4 = arith.constant 0 : index
    %3 = vector.load %arg3[%c0_3, %c0_4] : memref<1x512xf32, #tpu.memory_space<vmem>>, vector<1x512xf32>
    %4 = vector.broadcast %3 : vector<1x512xf32> to vector<8x512xf32>
    %5 = arith.addf %2, %4 : vector<8x512xf32>
    %cst_5 = arith.constant 0.000000e+00 : f32
    %6 = vector.broadcast %cst_5 : f32 to vector<8x512xf32>
    %7 = arith.cmpf ogt, %5, %6 : vector<8x512xf32>
    %cst_6 = arith.constant 0.00999999977 : f32
    %8 = vector.broadcast %cst_6 : f32 to vector<8x512xf32>
    %9 = arith.mulf %8, %5 : vector<8x512xf32>
    %10 = arith.select %7, %5, %9 : vector<8x512xi1>, vector<8x512xf32>
    %11 = arith.truncf %10 : vector<8x512xf32> to vector<8x512xbf16>
    %c0_7 = arith.constant 0 : index
    %c0_8 = arith.constant 0 : index
    %12 = vector.load %arg4[%c0_7, %c0_8] : memref<512x256xbf16, #tpu.memory_space<vmem>>, vector<512x256xbf16>
    %cst_9 = arith.constant dense<0.000000e+00> : vector<8x256xf32>
    %13 = tpu.matmul %11, %12, %cst_9 {dimension_numbers = #tpu.dot_dimension_numbers<[1], [0], [0], [1], [0, 0, 1, 1], [], []>} : vector<8x512xbf16>, vector<512x256xbf16>, vector<8x256xf32> -> vector<8x256xf32>
    %c0_10 = arith.constant 0 : index
    %c0_11 = arith.constant 0 : index
    %14 = vector.load %arg5[%c0_10, %c0_11] : memref<1x256xf32, #tpu.memory_space<vmem>>, vector<1x256xf32>
    %15 = vector.broadcast %14 : vector<1x256xf32> to vector<8x256xf32>
    %16 = arith.addf %13, %15 : vector<8x256xf32>
    %cst_12 = arith.constant 0.000000e+00 : f32
    %17 = vector.broadcast %cst_12 : f32 to vector<8x256xf32>
    %18 = arith.cmpf ogt, %16, %17 : vector<8x256xf32>
    %cst_13 = arith.constant 0.00999999977 : f32
    %19 = vector.broadcast %cst_13 : f32 to vector<8x256xf32>
    %20 = arith.mulf %19, %16 : vector<8x256xf32>
    %21 = arith.select %18, %16, %20 : vector<8x256xi1>, vector<8x256xf32>
    %c0_14 = arith.constant 0 : index
    %c0_15 = arith.constant 0 : index
    %22 = vector.load %arg6[%c0_14, %c0_15] : memref<1x256xf32, #tpu.memory_space<vmem>>, vector<1x256xf32>
    %23 = vector.broadcast %22 : vector<1x256xf32> to vector<8x256xf32>
    %24 = arith.mulf %21, %23 : vector<8x256xf32>
    %cst_16 = arith.constant dense<0.000000e+00> : vector<8xf32>
    %25 = vector.multi_reduction <add>, %24, %cst_16 [1] : vector<8x256xf32> to vector<8xf32>
    %26 = vector.shape_cast %25 : vector<8xf32> to vector<8x1xf32>
    %c0_17 = arith.constant 0 : index
    %c0_18 = arith.constant 0 : index
    %27 = vector.load %arg7[%c0_17, %c0_18] : memref<1x1xf32, #tpu.memory_space<vmem>>, vector<1x1xf32>
    %28 = vector.broadcast %27 : vector<1x1xf32> to vector<8x1xf32>
    %29 = arith.addf %26, %28 : vector<8x1xf32>
    %cst_19 = arith.constant 0.000000e+00 : f32
    %30 = vector.broadcast %cst_19 : f32 to vector<8x1xf32>
    %31 = arith.cmpf ogt, %29, %30 : vector<8x1xf32>
    %cst_20 = arith.constant 0.00999999977 : f32
    %32 = vector.broadcast %cst_20 : f32 to vector<8x1xf32>
    %33 = arith.mulf %32, %29 : vector<8x1xf32>
    %34 = arith.select %31, %29, %33 : vector<8x1xi1>, vector<8x1xf32>
    %c0_21 = arith.constant 0 : index
    %c0_22 = arith.constant 0 : index
    %35 = vector.load %arg8[%c0_21, %c0_22] : memref<8x1xf32, #tpu.memory_space<vmem>>, vector<8x1xf32>
    tpu.vector_store %arg8[%c0_21, %c0_22], %34 {strides = array<i32>} : memref<8x1xf32, #tpu.memory_space<vmem>>, vector<8x1xf32>,
    return
  }
  func.func @transform_0(%arg0: i32) -> (i32, i32) {
    %c0_i32 = arith.constant 0 : i32
    %c0_i32_0 = arith.constant 0 : i32
    return %arg0, %c0_i32 : i32, i32
  }
  func.func @transform_1(%arg0: i32) -> (i32, i32) {
    %c0_i32 = arith.constant 0 : i32
    %c0_i32_0 = arith.constant 0 : i32
    %c0_i32_1 = arith.constant 0 : i32
    return %c0_i32, %c0_i32_0 : i32, i32
  }
  func.func @transform_2(%arg0: i32) -> (i32, i32) {
    %c0_i32 = arith.constant 0 : i32
    %c0_i32_0 = arith.constant 0 : i32
    %c0_i32_1 = arith.constant 0 : i32
    return %c0_i32, %c0_i32_0 : i32, i32
  }
  func.func @transform_3(%arg0: i32) -> (i32, i32) {
    %c0_i32 = arith.constant 0 : i32
    %c0_i32_0 = arith.constant 0 : i32
    %c0_i32_1 = arith.constant 0 : i32
    return %c0_i32, %c0_i32_0 : i32, i32
  }
  func.func @transform_4(%arg0: i32) -> (i32, i32) {
    %c0_i32 = arith.constant 0 : i32
    %c0_i32_0 = arith.constant 0 : i32
    %c0_i32_1 = arith.constant 0 : i32
    return %c0_i32, %c0_i32_0 : i32, i32
  }
  func.func @transform_5(%arg0: i32) -> (i32, i32) {
    %c0_i32 = arith.constant 0 : i32
    %c0_i32_0 = arith.constant 0 : i32
    %c0_i32_1 = arith.constant 0 : i32
    return %c0_i32, %c0_i32_0 : i32, i32
  }
  func.func @transform_6(%arg0: i32) -> (i32, i32) {
    %c0_i32 = arith.constant 0 : i32
    %c0_i32_0 = arith.constant 0 : i32
    %c0_i32_1 = arith.constant 0 : i32
    return %c0_i32, %c0_i32_0 : i32, i32
  }
  func.func @transform_7(%arg0: i32) -> (i32, i32) {
    %c0_i32 = arith.constant 0 : i32
    %c0_i32_0 = arith.constant 0 : i32
    return %arg0, %c0_i32 : i32, i32
  }
}

</mosaic_0001>

<llo_original>
// kernel: tpu_custom_call.1
$region0: #{tpu_custom_call.1}
  #allocation0 [shape = 'u32[]', space=smem, size = 0x4, offset = 0x4, fixed_abs, tag = 'smem constant byte address 0x4 - core index']
  #allocation1 [shape = 'u32[144,128]{1,0:T(1,128)}', space=vmem, size = 0x12000, scoped, tag = 'internal scratch']
  #allocation2 [shape = 'f32[1,1]{1,0:T(1,128)S(1)}', space=vmem, size = 0x200, scoped, tag = 'scoped memory for tpu_custom_call.1']
  %s0 = inlined_call_operand.hbm [shape: bf16[8,10], index: 0, kind: input, shape index: {}]
  %s1 = inlined_call_operand.hbm [shape: bf16[10,512], index: 1, kind: input, shape index: {}]
  %s2 = inlined_call_operand.vmem [shape: f32[1,512], index: 2, kind: input, shape index: {}]
  %s3 = inlined_call_operand.hbm [shape: bf16[512,256], index: 3, kind: input, shape index: {}]
  %s4 = inlined_call_operand.vmem [shape: f32[1,256], index: 4, kind: input, shape index: {}]
  %s5 = inlined_call_operand.vmem [shape: f32[1,256], index: 5, kind: input, shape index: {}]
  %s6 = inlined_call_operand.<no memory space> [shape: f32[1,1], index: 6, kind: input, shape index: {}]
  %s7 = inlined_call_operand.vmem [shape: f32[8,1], index: 7, kind: output, shape index: {}]
  %s8 = sld [smem:[#allocation0]]
  $region50: #{tpu_custom_call.1} parent=0
    _
  %s10 = ssub.s32 1, %s8
  %s11 = scalar_select 0, %s10, %s8
  %v12 = vstv %s6
  %13 = vst [vmem:[#allocation2] sm:$0x1] %v12
  $region1: #{tpu_custom_call.1} parent=0
    #allocation3 [shape = 'u8[2048]{0}', space=vmem, size = 0x800, scoped, tag = 'input window, operand 0, single buffered']
    #allocation4 [shape = 's32[1]{0}', space=sflag, size = 0x4, scoped, tag = 'scoped memory for tpu_custom_call.1']
    #allocation5 [shape = 'u8[16384]{0}', space=vmem, size = 0x4000, scoped, tag = 'input window, operand 1, single buffered']
    #allocation6 [shape = 's32[1]{0}', space=sflag, size = 0x4, scoped, tag = 'scoped memory for tpu_custom_call.1']
    #allocation7 [shape = 'u8[262144]{0}', space=vmem, size = 0x40000, scoped, tag = 'input window, operand 3, single buffered']
    %14 = vsyncpa [#allocation4], 0
    %15 = vsyncpa [#allocation6], 0
    // Predicated region
    $region2: #{tpu_custom_call.1} parent=1 // pred_check
      _
    $region3: #{tpu_custom_call.1} parent=1 // pred_check_branch
      %17 = sbr.rel (0) target = $region5
    $region4: #{tpu_custom_call.1} parent=1 // pred_region
      %s19 = ssub.s32 64, 64
      %20 = vsyncadd [#allocation4], %s19
      %s22 = sshll.u32 [#allocation3], 4
      %s23 = int_to_ptr.vmem [resolvable:$true] %s22
      %25 = dma.hbm_to_vmem [thread:$0]  %s0, 64, %s23, [#allocation4]
    $region5: #{tpu_custom_call.1} parent=1 // pred_fallthru
      _
    // Predicated region
    $region6: #{tpu_custom_call.1} parent=1 // pred_check
      _
    $region7: #{tpu_custom_call.1} parent=1 // pred_check_branch
      %27 = sbr.rel (0) target = $region9
    $region8: #{tpu_custom_call.1} parent=1 // pred_region
      %s29 = ssub.s32 512, 512
      %30 = vsyncadd [#allocation6], %s29
      %s31 = sshll.u32 [#allocation5], 4
      %s32 = int_to_ptr.vmem [resolvable:$true] %s31
      %37 = dma.hbm_to_vmem [thread:$0]  %s1, 512, %s32, [#allocation6], 256, 256, 16
    $region9: #{tpu_custom_call.1} parent=1 // pred_fallthru
      _
    // Predicated region
    $region10: #{tpu_custom_call.1} parent=1 // pred_check
      _
    $region11: #{tpu_custom_call.1} parent=1 // pred_check_branch
      %39 = sbr.rel (0) target = $region13
    $region12: #{tpu_custom_call.1} parent=1 // pred_region
      _
    $region13: #{tpu_custom_call.1} parent=1 // pred_fallthru
      _
    // Predicated region
    $region14: #{tpu_custom_call.1} parent=1 // pred_check
      _
    $region15: #{tpu_custom_call.1} parent=1 // pred_check_branch
      %41 = sbr.rel (0) target = $region17
    $region16: #{tpu_custom_call.1} parent=1 // pred_region
      %s43 = ssub.s32 8192, 8192
      %44 = vsyncadd [#allocation6], %s43
      %s45 = sshll.u32 [#allocation7], 4
      %s46 = int_to_ptr.vmem [resolvable:$true] %s45
      %51 = dma.hbm_to_vmem [thread:$0]  %s3, 8192, %s46, [#allocation6], 128, 128, 8
    $region17: #{tpu_custom_call.1} parent=1 // pred_fallthru
      _
    // Predicated region
    $region18: #{tpu_custom_call.1} parent=1 // pred_check
      _
    $region19: #{tpu_custom_call.1} parent=1 // pred_check_branch
      %53 = sbr.rel (0) target = $region21
    $region20: #{tpu_custom_call.1} parent=1 // pred_region
      _
    $region21: #{tpu_custom_call.1} parent=1 // pred_fallthru
      _
    // Predicated region
    $region22: #{tpu_custom_call.1} parent=1 // pred_check
      _
    $region23: #{tpu_custom_call.1} parent=1 // pred_check_branch
      %55 = sbr.rel (0) target = $region25
    $region24: #{tpu_custom_call.1} parent=1 // pred_region
      _
    $region25: #{tpu_custom_call.1} parent=1 // pred_fallthru
      _
    // Predicated region
    $region26: #{tpu_custom_call.1} parent=1 // pred_check
      _
    $region27: #{tpu_custom_call.1} parent=1 // pred_check_branch
      %57 = sbr.rel (0) target = $region29
    $region28: #{tpu_custom_call.1} parent=1 // pred_region
      _
    $region29: #{tpu_custom_call.1} parent=1 // pred_fallthru
      _
    // Predicated region
    $region30: #{tpu_custom_call.1} parent=1 // pred_check
      _
    $region31: #{tpu_custom_call.1} parent=1 // pred_check_branch
      %59 = sbr.rel (0) target = $region33
    $region32: #{tpu_custom_call.1} parent=1 // pred_region
      %60 = dma.done [#allocation4], 64
    $region33: #{tpu_custom_call.1} parent=1 // pred_fallthru
      _
    // Predicated region
    $region34: #{tpu_custom_call.1} parent=1 // pred_check
      _
    $region35: #{tpu_custom_call.1} parent=1 // pred_check_branch
      %62 = sbr.rel (0) target = $region37
    $region36: #{tpu_custom_call.1} parent=1 // pred_region
      %63 = dma.done [#allocation6], 512
    $region37: #{tpu_custom_call.1} parent=1 // pred_fallthru
      _
    // Predicated region
    $region38: #{tpu_custom_call.1} parent=1 // pred_check
      _
    $region39: #{tpu_custom_call.1} parent=1 // pred_check_branch
      %65 = sbr.rel (0) target = $region41
    $region40: #{tpu_custom_call.1} parent=1 // pred_region
      %66 = dma.done [#allocation6], 8192
    $region41: #{tpu_custom_call.1} parent=1 // pred_fallthru
      _
    %v68 = vld [vmem:[#allocation3] sm:$0xf]
    %v69 = vld [vmem:[#allocation5] sm:$0xff]
    %v70 = vld [vmem:[#allocation5 + $0x8] sm:$0xff]
    %v71 = vld [vmem:[#allocation5 + $0x10] sm:$0x11]
    %v72 = vld [vmem:[#allocation5 + $0x18] sm:$0x11]
    %v73 = vld [vmem:[%s2] sm:$0xf]
    %v75 = vlaneseq
    %v76 = vshrl.u32 %v75, 7
    %v77 = vsub.s32 0, %v76
    %v78 = vrot.slane %v73, %v77
    %v79 = vlaneseq
    %v80 = vshrl.u32 %v79, 7
    %v81 = vsub.s32 1, %v80
    %v82 = vrot.slane %v73, %v81
    %v83 = vlaneseq
    %v84 = vshrl.u32 %v83, 7
    %v85 = vsub.s32 2, %v84
    %v86 = vrot.slane %v73, %v85
    %v87 = vlaneseq
    %v88 = vshrl.u32 %v87, 7
    %v89 = vsub.s32 3, %v88
    %v90 = vrot.slane %v73, %v89
    %v99 = vunpack.c.l.b16 %v69
    %v100 = vunpack.c.h.b16 %v69
    %v101 = vunpack.c.l.b16 %v70
    %v102 = vunpack.c.h.b16 %v70
    %v103 = vunpack.c.l.b16 %v71
    %v104 = vunpack.c.h.b16 %v71
    %v105 = vunpack.c.l.b16 %v72
    %v106 = vunpack.c.h.b16 %v72
    %v107 = vpack.c.b16 %v103, %v99
    %v108 = vpack.c.b16 %v104, %v100
    %v109 = vpack.c.b16 %v105, %v101
    %v110 = vpack.c.b16 %v106, %v102
    %vm111 = vcmask 80896
    %v113 = vsel %vm111, %v68, 0
    %vm115 = vcmask 1044480
    %v117 = vsel %vm115, %v107, 0
    %v120 = vsel %vm115, %v108, 0
    %v123 = vsel %vm115, %v109, 0
    %v126 = vsel %vm115, %v110, 0
    %128 = vmatprep.subr.bf16.mxu0 %v120
    %129 = vmatpush1.bf16.msra.mxu0 %v117
    %130 = vmatprep.subr.bf16.mxu0 0
    %131 = vmatpush1.bf16.msra.mxu0 0
    %132 = vmatprep.subr.bf16.mxu0 0
    %133 = vmatpush1.bf16.msra.mxu0 0
    %134 = vmatprep.subr.bf16.mxu0 0
    %135 = vmatpush1.bf16.msra.mxu0 0
    %136 = vmatprep.subr.bf16.mxu0 0
    %137 = vmatpush1.bf16.msra.mxu0 0
    %138 = vmatprep.subr.bf16.mxu0 0
    %139 = vmatpush1.bf16.msra.mxu0 0
    %140 = vmatprep.subr.bf16.mxu0 0
    %141 = vmatpush1.bf16.msra.mxu0 0
    %142 = vmatprep.subr.bf16.mxu0 0
    %143 = vmatpush1.bf16.msra.mxu0 0
    %144 = vmatprep.subr.bf16.mxu0 0
    %145 = vmatpush1.bf16.msra.mxu0 0
    %146 = vmatprep.subr.bf16.mxu0 0
    %147 = vmatpush1.bf16.msra.mxu0 0
    %148 = vmatprep.subr.bf16.mxu0 0
    %149 = vmatpush1.bf16.msra.mxu0 0
    %150 = vmatprep.subr.bf16.mxu0 0
    %151 = vmatpush1.bf16.msra.mxu0 0
    %152 = vmatprep.subr.bf16.mxu0 0
    %153 = vmatpush1.bf16.msra.mxu0 0
    %154 = vmatprep.subr.bf16.mxu0 0
    %155 = vmatpush1.bf16.msra.mxu0 0
    %156 = vmatprep.subr.bf16.mxu0 0
    %157 = vmatpush1.bf16.msra.mxu0 0
    %158 = vmatprep.subr.bf16.mxu0 0
    %159 = vmatpush1.bf16.msra.mxu0 0
    %160 = vmatprep.mubr.bf16.mxu0 0
    %161 = vmatmul.mubr.bf16.gmra.mrb[0].mxu0 %v113
    %v162 = vpop.f32.mrb[0].mxu0
    %v163 = vadd.f32 %v78, %v162
    %v164 = vpop.f32.mrb[0].mxu0
    %v165 = vadd.f32 %v82, %v164
    %v166 = vpop.f32.mrb[0].mxu0
    %v167 = vpop.f32.mrb[0].mxu0
    %168 = vdwg.mxu0
    %169 = vmatprep.subr.bf16.mxu0 %v126
    %170 = vmatpush1.bf16.msra.mxu0 %v123
    %171 = vmatprep.subr.bf16.mxu0 0
    %172 = vmatpush1.bf16.msra.mxu0 0
    %173 = vmatprep.subr.bf16.mxu0 0
    %174 = vmatpush1.bf16.msra.mxu0 0
    %175 = vmatprep.subr.bf16.mxu0 0
    %176 = vmatpush1.bf16.msra.mxu0 0
    %177 = vmatprep.subr.bf16.mxu0 0
    %178 = vmatpush1.bf16.msra.mxu0 0
    %179 = vmatprep.subr.bf16.mxu0 0
    %180 = vmatpush1.bf16.msra.mxu0 0
    %181 = vmatprep.subr.bf16.mxu0 0
    %182 = vmatpush1.bf16.msra.mxu0 0
    %183 = vmatprep.subr.bf16.mxu0 0
    %184 = vmatpush1.bf16.msra.mxu0 0
    %185 = vmatprep.subr.bf16.mxu0 0
    %186 = vmatpush1.bf16.msra.mxu0 0
    %187 = vmatprep.subr.bf16.mxu0 0
    %188 = vmatpush1.bf16.msra.mxu0 0
    %189 = vmatprep.subr.bf16.mxu0 0
    %190 = vmatpush1.bf16.msra.mxu0 0
    %191 = vmatprep.subr.bf16.mxu0 0
    %192 = vmatpush1.bf16.msra.mxu0 0
    %193 = vmatprep.subr.bf16.mxu0 0
    %194 = vmatpush1.bf16.msra.mxu0 0
    %195 = vmatprep.subr.bf16.mxu0 0
    %196 = vmatpush1.bf16.msra.mxu0 0
    %197 = vmatprep.subr.bf16.mxu0 0
    %198 = vmatpush1.bf16.msra.mxu0 0
    %199 = vmatprep.subr.bf16.mxu0 0
    %200 = vmatpush1.bf16.msra.mxu0 0
    %201 = vmatprep.mubr.bf16.mxu0 0
    %202 = vmatmul.mubr.bf16.gmra.mrb[0].mxu0 %v113
    %v203 = vpop.f32.mrb[0].mxu0
    %v204 = vadd.f32 %v86, %v203
    %v205 = vpop.f32.mrb[0].mxu0
    %v206 = vadd.f32 %v90, %v205
    %v207 = vpop.f32.mrb[0].mxu0
    %v208 = vpop.f32.mrb[0].mxu0
    %209 = vdwg.mxu0
    %vm210 = vcmp.gt.f32.partialorder %v163, 0.0
    %vm211 = vcmp.gt.f32.partialorder %v165, 0.0
    %vm212 = vcmp.gt.f32.partialorder %v204, 0.0
    %vm213 = vcmp.gt.f32.partialorder %v206, 0.0
    %v214 = vmul.f32 %v163, 0.01
    %v215 = vmul.f32 %v165, 0.01
    %v216 = vmul.f32 %v204, 0.01
    %v217 = vmul.f32 %v206, 0.01
    %v218 = vsel %vm210, %v163, %v214
    %v219 = vsel %vm211, %v165, %v215
    %v220 = vsel %vm212, %v204, %v216
    %v221 = vsel %vm213, %v206, %v217
    %v222 = vpack.c.bf16 %v218, %v218
    %v223 = vpack.c.bf16 %v219, %v219
    %v224 = vpack.c.bf16 %v220, %v220
    %v225 = vpack.c.bf16 %v221, %v221
    %v226 = vld [vmem:[#allocation7] sm:$0xff]
    %v227 = vld [vmem:[#allocation7 + $0x8] sm:$0xff]
    %v228 = vld [vmem:[#allocation7 + $0x10] sm:$0xff]
    %v229 = vld [vmem:[#allocation7 + $0x18] sm:$0xff]
    %v230 = vld [vmem:[#allocation7 + $0x20] sm:$0xff]
    %v231 = vld [vmem:[#allocation7 + $0x28] sm:$0xff]
    %v232 = vld [vmem:[#allocation7 + $0x30] sm:$0xff]
    %v233 = vld [vmem:[#allocation7 + $0x38] sm:$0xff]
    %v234 = vld [vmem:[#allocation7 + $0x40] sm:$0xff]
    %v235 = vld [vmem:[#allocation7 + $0x48] sm:$0xff]
    %v236 = vld [vmem:[#allocation7 + $0x50] sm:$0xff]
    %v237 = vld [vmem:[#allocation7 + $0x58] sm:$0xff]
    %v238 = vld [vmem:[#allocation7 + $0x60] sm:$0xff]
    %v239 = vld [vmem:[#allocation7 + $0x68] sm:$0xff]
    %v240 = vld [vmem:[#allocation7 + $0x70] sm:$0xff]
    %v241 = vld [vmem:[#allocation7 + $0x78] sm:$0xff]
    %v242 = vld [vmem:[#allocation7 + $0x80] sm:$0xff]
    %v243 = vld [vmem:[#allocation7 + $0x88] sm:$0xff]
    %v244 = vld [vmem:[#allocation7 + $0x90] sm:$0xff]
    %v245 = vld [vmem:[#allocation7 + $0x98] sm:$0xff]
    %v246 = vld [vmem:[#allocation7 + $0xa0] sm:$0xff]
    %v247 = vld [vmem:[#allocation7 + $0xa8] sm:$0xff]
    %v248 = vld [vmem:[#allocation7 + $0xb0] sm:$0xff]
    %v249 = vld [vmem:[#allocation7 + $0xb8] sm:$0xff]
    %v250 = vld [vmem:[#allocation7 + $0xc0] sm:$0xff]
    %v251 = vld [vmem:[#allocation7 + $0xc8] sm:$0xff]
    %v252 = vld [vmem:[#allocation7 + $0xd0] sm:$0xff]
    %v253 = vld [vmem:[#allocation7 + $0xd8] sm:$0xff]
    %v254 = vld [vmem:[#allocation7 + $0xe0] sm:$0xff]
    %v255 = vld [vmem:[#allocation7 + $0xe8] sm:$0xff]
    %v256 = vld [vmem:[#allocation7 + $0xf0] sm:$0xff]
    %v257 = vld [vmem:[#allocation7 + $0xf8] sm:$0xff]
    %v258 = vld [vmem:[#allocation7 + $0x100] sm:$0xff]
    %v259 = vld [vmem:[#allocation7 + $0x108] sm:$0xff]
    %v260 = vld [vmem:[#allocation7 + $0x110] sm:$0xff]
    %v261 = vld [vmem:[#allocation7 + $0x118] sm:$0xff]
    %v262 = vld [vmem:[#allocation7 + $0x120] sm:$0xff]
    %v263 = vld [vmem:[#allocation7 + $0x128] sm:$0xff]
    %v264 = vld [vmem:[#allocation7 + $0x130] sm:$0xff]
    %v265 = vld [vmem:[#allocation7 + $0x138] sm:$0xff]
    %v266 = vld [vmem:[#allocation7 + $0x140] sm:$0xff]
    %v267 = vld [vmem:[#allocation7 + $0x148] sm:$0xff]
    %v268 = vld [vmem:[#allocation7 + $0x150] sm:$0xff]
    %v269 = vld [vmem:[#allocation7 + $0x158] sm:$0xff]
    %v270 = vld [vmem:[#allocation7 + $0x160] sm:$0xff]
    %v271 = vld [vmem:[#allocation7 + $0x168] sm:$0xff]
    %v272 = vld [vmem:[#allocation7 + $0x170] sm:$0xff]
    %v273 = vld [vmem:[#allocation7 + $0x178] sm:$0xff]
    %v274 = vld [vmem:[#allocation7 + $0x180] sm:$0xff]
    %v275 = vld [vmem:[#allocation7 + $0x188] sm:$0xff]
    %v276 = vld [vmem:[#allocation7 + $0x190] sm:$0xff]
    %v277 = vld [vmem:[#allocation7 + $0x198] sm:$0xff]
    %v278 = vld [vmem:[#allocation7 + $0x1a0] sm:$0xff]
    %v279 = vld [vmem:[#allocation7 + $0x1a8] sm:$0xff]
    %v280 = vld [vmem:[#allocation7 + $0x1b0] sm:$0xff]
    %v281 = vld [vmem:[#allocation7 + $0x1b8] sm:$0xff]
    %v282 = vld [vmem:[#allocation7 + $0x1c0] sm:$0xff]
    %v283 = vld [vmem:[#allocation7 + $0x1c8] sm:$0xff]
    %v284 = vld [vmem:[#allocation7 + $0x1d0] sm:$0xff]
    %v285 = vld [vmem:[#allocation7 + $0x1d8] sm:$0xff]
    %v286 = vld [vmem:[#allocation7 + $0x1e0] sm:$0xff]
    %v287 = vld [vmem:[#allocation7 + $0x1e8] sm:$0xff]
    %v288 = vld [vmem:[#allocation7 + $0x1f0] sm:$0xff]
    %v289 = vld [vmem:[#allocation7 + $0x1f8] sm:$0xff]
    %v290 = vld [vmem:[%s4] sm:$0x3]
    %v292 = vlaneseq
    %v293 = vshrl.u32 %v292, 7
    %v294 = vsub.s32 0, %v293
    %v295 = vrot.slane %v290, %v294
    %v296 = vlaneseq
    %v297 = vshrl.u32 %v296, 7
    %v298 = vsub.s32 1, %v297
    %v299 = vrot.slane %v290, %v298
    %v366 = vunpack.c.l.b16 %v226
    %v367 = vunpack.c.h.b16 %v226
    %v368 = vunpack.c.l.b16 %v227
    %v369 = vunpack.c.h.b16 %v227
    %v370 = vunpack.c.l.b16 %v228
    %v371 = vunpack.c.h.b16 %v228
    %v372 = vunpack.c.l.b16 %v229
    %v373 = vunpack.c.h.b16 %v229
    %v374 = vunpack.c.l.b16 %v230
    %v375 = vunpack.c.h.b16 %v230
    %v376 = vunpack.c.l.b16 %v231
    %v377 = vunpack.c.h.b16 %v231
    %v378 = vunpack.c.l.b16 %v232
    %v379 = vunpack.c.h.b16 %v232
    %v380 = vunpack.c.l.b16 %v233
    %v381 = vunpack.c.h.b16 %v233
    %v382 = vunpack.c.l.b16 %v234
    %v383 = vunpack.c.h.b16 %v234
    %v384 = vunpack.c.l.b16 %v235
    %v385 = vunpack.c.h.b16 %v235
    %v386 = vunpack.c.l.b16 %v236
    %v387 = vunpack.c.h.b16 %v236
    %v388 = vunpack.c.l.b16 %v237
    %v389 = vunpack.c.h.b16 %v237
    %v390 = vunpack.c.l.b16 %v238
    %v391 = vunpack.c.h.b16 %v238
    %v392 = vunpack.c.l.b16 %v239
    %v393 = vunpack.c.h.b16 %v239
    %v394 = vunpack.c.l.b16 %v240
    %v395 = vunpack.c.h.b16 %v240
    %v396 = vunpack.c.l.b16 %v241
    %v397 = vunpack.c.h.b16 %v241
    %v398 = vunpack.c.l.b16 %v242
    %v399 = vunpack.c.h.b16 %v242
    %v400 = vunpack.c.l.b16 %v243
    %v401 = vunpack.c.h.b16 %v243
    %v402 = vunpack.c.l.b16 %v244
    %v403 = vunpack.c.h.b16 %v244
    %v404 = vunpack.c.l.b16 %v245
    %v405 = vunpack.c.h.b16 %v245
    %v406 = vunpack.c.l.b16 %v246
    %v407 = vunpack.c.h.b16 %v246
    %v408 = vunpack.c.l.b16 %v247
    %v409 = vunpack.c.h.b16 %v247
    %v410 = vunpack.c.l.b16 %v248
    %v411 = vunpack.c.h.b16 %v248
    %v412 = vunpack.c.l.b16 %v249
    %v413 = vunpack.c.h.b16 %v249
    %v414 = vunpack.c.l.b16 %v250
    %v415 = vunpack.c.h.b16 %v250
    %v416 = vunpack.c.l.b16 %v251
    %v417 = vunpack.c.h.b16 %v251
    %v418 = vunpack.c.l.b16 %v252
    %v419 = vunpack.c.h.b16 %v252
    %v420 = vunpack.c.l.b16 %v253
    %v421 = vunpack.c.h.b16 %v253
    %v422 = vunpack.c.l.b16 %v254
    %v423 = vunpack.c.h.b16 %v254
    %v424 = vunpack.c.l.b16 %v255
    %v425 = vunpack.c.h.b16 %v255
    %v426 = vunpack.c.l.b16 %v256
    %v427 = vunpack.c.h.b16 %v256
    %v428 = vunpack.c.l.b16 %v257
    %v429 = vunpack.c.h.b16 %v257
    %v430 = vunpack.c.l.b16 %v258
    %v431 = vunpack.c.h.b16 %v258
    %v432 = vunpack.c.l.b16 %v259
    %v433 = vunpack.c.h.b16 %v259
    %v434 = vunpack.c.l.b16 %v260
    %v435 = vunpack.c.h.b16 %v260
    %v436 = vunpack.c.l.b16 %v261
    %v437 = vunpack.c.h.b16 %v261
    %v438 = vunpack.c.l.b16 %v262
    %v439 = vunpack.c.h.b16 %v262
    %v440 = vunpack.c.l.b16 %v263
    %v441 = vunpack.c.h.b16 %v263
    %v442 = vunpack.c.l.b16 %v264
    %v443 = vunpack.c.h.b16 %v264
    %v444 = vunpack.c.l.b16 %v265
    %v445 = vunpack.c.h.b16 %v265
    %v446 = vunpack.c.l.b16 %v266
    %v447 = vunpack.c.h.b16 %v266
    %v448 = vunpack.c.l.b16 %v267
    %v449 = vunpack.c.h.b16 %v267
    %v450 = vunpack.c.l.b16 %v268
    %v451 = vunpack.c.h.b16 %v268
    %v452 = vunpack.c.l.b16 %v269
    %v453 = vunpack.c.h.b16 %v269
    %v454 = vunpack.c.l.b16 %v270
    %v455 = vunpack.c.h.b16 %v270
    %v456 = vunpack.c.l.b16 %v271
    %v457 = vunpack.c.h.b16 %v271
    %v458 = vunpack.c.l.b16 %v272
    %v459 = vunpack.c.h.b16 %v272
    %v460 = vunpack.c.l.b16 %v273
    %v461 = vunpack.c.h.b16 %v273
    %v462 = vunpack.c.l.b16 %v274
    %v463 = vunpack.c.h.b16 %v274
    %v464 = vunpack.c.l.b16 %v275
    %v465 = vunpack.c.h.b16 %v275
    %v466 = vunpack.c.l.b16 %v276
    %v467 = vunpack.c.h.b16 %v276
    %v468 = vunpack.c.l.b16 %v277
    %v469 = vunpack.c.h.b16 %v277
    %v470 = vunpack.c.l.b16 %v278
    %v471 = vunpack.c.h.b16 %v278
    %v472 = vunpack.c.l.b16 %v279
    %v473 = vunpack.c.h.b16 %v279
    %v474 = vunpack.c.l.b16 %v280
    %v475 = vunpack.c.h.b16 %v280
    %v476 = vunpack.c.l.b16 %v281
    %v477 = vunpack.c.h.b16 %v281
    %v478 = vunpack.c.l.b16 %v282
    %v479 = vunpack.c.h.b16 %v282
    %v480 = vunpack.c.l.b16 %v283
    %v481 = vunpack.c.h.b16 %v283
    %v482 = vunpack.c.l.b16 %v284
    %v483 = vunpack.c.h.b16 %v284
    %v484 = vunpack.c.l.b16 %v285
    %v485 = vunpack.c.h.b16 %v285
    %v486 = vunpack.c.l.b16 %v286
    %v487 = vunpack.c.h.b16 %v286
    %v488 = vunpack.c.l.b16 %v287
    %v489 = vunpack.c.h.b16 %v287
    %v490 = vunpack.c.l.b16 %v288
    %v491 = vunpack.c.h.b16 %v288
    %v492 = vunpack.c.l.b16 %v289
    %v493 = vunpack.c.h.b16 %v289
    %v494 = vpack.c.b16 %v368, %v366
    %v495 = vpack.c.b16 %v369, %v367
    %v496 = vpack.c.b16 %v372, %v370
    %v497 = vpack.c.b16 %v373, %v371
    %v498 = vpack.c.b16 %v376, %v374
    %v499 = vpack.c.b16 %v377, %v375
    %v500 = vpack.c.b16 %v380, %v378
    %v501 = vpack.c.b16 %v381, %v379
    %v502 = vpack.c.b16 %v384, %v382
    %v503 = vpack.c.b16 %v385, %v383
    %v504 = vpack.c.b16 %v388, %v386
    %v505 = vpack.c.b16 %v389, %v387
    %v506 = vpack.c.b16 %v392, %v390
    %v507 = vpack.c.b16 %v393, %v391
    %v508 = vpack.c.b16 %v396, %v394
    %v509 = vpack.c.b16 %v397, %v395
    %v510 = vpack.c.b16 %v400, %v398
    %v511 = vpack.c.b16 %v401, %v399
    %v512 = vpack.c.b16 %v404, %v402
    %v513 = vpack.c.b16 %v405, %v403
    %v514 = vpack.c.b16 %v408, %v406
    %v515 = vpack.c.b16 %v409, %v407
    %v516 = vpack.c.b16 %v412, %v410
    %v517 = vpack.c.b16 %v413, %v411
    %v518 = vpack.c.b16 %v416, %v414
    %v519 = vpack.c.b16 %v417, %v415
    %v520 = vpack.c.b16 %v420, %v418
    %v521 = vpack.c.b16 %v421, %v419
    %v522 = vpack.c.b16 %v424, %v422
    %v523 = vpack.c.b16 %v425, %v423
    %v524 = vpack.c.b16 %v428, %v426
    %v525 = vpack.c.b16 %v429, %v427
    %v526 = vpack.c.b16 %v432, %v430
    %v527 = vpack.c.b16 %v433, %v431
    %v528 = vpack.c.b16 %v436, %v434
    %v529 = vpack.c.b16 %v437, %v435
    %v530 = vpack.c.b16 %v440, %v438
    %v531 = vpack.c.b16 %v441, %v439
    %v532 = vpack.c.b16 %v444, %v442
    %v533 = vpack.c.b16 %v445, %v443
    %v534 = vpack.c.b16 %v448, %v446
    %v535 = vpack.c.b16 %v449, %v447
    %v536 = vpack.c.b16 %v452, %v450
    %v537 = vpack.c.b16 %v453, %v451
    %v538 = vpack.c.b16 %v456, %v454
    %v539 = vpack.c.b16 %v457, %v455
    %v540 = vpack.c.b16 %v460, %v458
    %v541 = vpack.c.b16 %v461, %v459
    %v542 = vpack.c.b16 %v464, %v462
    %v543 = vpack.c.b16 %v465, %v463
    %v544 = vpack.c.b16 %v468, %v466
    %v545 = vpack.c.b16 %v469, %v467
    %v546 = vpack.c.b16 %v472, %v470
    %v547 = vpack.c.b16 %v473, %v471
    %v548 = vpack.c.b16 %v476, %v474
    %v549 = vpack.c.b16 %v477, %v475
    %v550 = vpack.c.b16 %v480, %v478
    %v551 = vpack.c.b16 %v481, %v479
    %v552 = vpack.c.b16 %v484, %v482
    %v553 = vpack.c.b16 %v485, %v483
    %v554 = vpack.c.b16 %v488, %v486
    %v555 = vpack.c.b16 %v489, %v487
    %v556 = vpack.c.b16 %v492, %v490
    %v557 = vpack.c.b16 %v493, %v491
    %622 = vmatprep.subr.bf16.mxu0 %v495
    %623 = vmatpush1.bf16.msra.mxu0 %v494
    %624 = vmatprep.subr.bf16.mxu0 %v497
    %625 = vmatpush1.bf16.msra.mxu0 %v496
    %626 = vmatprep.subr.bf16.mxu0 %v499
    %627 = vmatpush1.bf16.msra.mxu0 %v498
    %628 = vmatprep.subr.bf16.mxu0 %v501
    %629 = vmatpush1.bf16.msra.mxu0 %v500
    %630 = vmatprep.subr.bf16.mxu0 %v503
    %631 = vmatpush1.bf16.msra.mxu0 %v502
    %632 = vmatprep.subr.bf16.mxu0 %v505
    %633 = vmatpush1.bf16.msra.mxu0 %v504
    %634 = vmatprep.subr.bf16.mxu0 %v507
    %635 = vmatpush1.bf16.msra.mxu0 %v506
    %636 = vmatprep.subr.bf16.mxu0 %v509
    %637 = vmatpush1.bf16.msra.mxu0 %v508
    %638 = vmatprep.subr.bf16.mxu0 %v511
    %639 = vmatpush1.bf16.msra.mxu0 %v510
    %640 = vmatprep.subr.bf16.mxu0 %v513
    %641 = vmatpush1.bf16.msra.mxu0 %v512
    %642 = vmatprep.subr.bf16.mxu0 %v515
    %643 = vmatpush1.bf16.msra.mxu0 %v514
    %644 = vmatprep.subr.bf16.mxu0 %v517
    %645 = vmatpush1.bf16.msra.mxu0 %v516
    %646 = vmatprep.subr.bf16.mxu0 %v519
    %647 = vmatpush1.bf16.msra.mxu0 %v518
    %648 = vmatprep.subr.bf16.mxu0 %v521
    %649 = vmatpush1.bf16.msra.mxu0 %v520
    %650 = vmatprep.subr.bf16.mxu0 %v523
    %651 = vmatpush1.bf16.msra.mxu0 %v522
    %652 = vmatprep.subr.bf16.mxu0 %v525
    %653 = vmatpush1.bf16.msra.mxu0 %v524
    %654 = vmatprep.mubr.bf16.mxu0 %v223
    %655 = vmatmul.mubr.bf16.gmra.mrb[0].mxu0 %v222
    %v656 = vpop.f32.mrb[0].mxu0
    %v657 = vadd.f32 %v295, %v656
    %v658 = vpop.f32.mrb[0].mxu0
    %v659 = vadd.f32 %v299, %v658
    %v660 = vpop.f32.mrb[0].mxu0
    %v661 = vpop.f32.mrb[0].mxu0
    %662 = vdwg.mxu0
    %663 = vmatprep.subr.bf16.mxu0 %v527
    %664 = vmatpush1.bf16.msra.mxu0 %v526
    %665 = vmatprep.subr.bf16.mxu0 %v529
    %666 = vmatpush1.bf16.msra.mxu0 %v528
    %667 = vmatprep.subr.bf16.mxu0 %v531
    %668 = vmatpush1.bf16.msra.mxu0 %v530
    %669 = vmatprep.subr.bf16.mxu0 %v533
    %670 = vmatpush1.bf16.msra.mxu0 %v532
    %671 = vmatprep.subr.bf16.mxu0 %v535
    %672 = vmatpush1.bf16.msra.mxu0 %v534
    %673 = vmatprep.subr.bf16.mxu0 %v537
    %674 = vmatpush1.bf16.msra.mxu0 %v536
    %675 = vmatprep.subr.bf16.mxu0 %v539
    %676 = vmatpush1.bf16.msra.mxu0 %v538
    %677 = vmatprep.subr.bf16.mxu0 %v541
    %678 = vmatpush1.bf16.msra.mxu0 %v540
    %679 = vmatprep.subr.bf16.mxu0 %v543
    %680 = vmatpush1.bf16.msra.mxu0 %v542
    %681 = vmatprep.subr.bf16.mxu0 %v545
    %682 = vmatpush1.bf16.msra.mxu0 %v544
    %683 = vmatprep.subr.bf16.mxu0 %v547
    %684 = vmatpush1.bf16.msra.mxu0 %v546
    %685 = vmatprep.subr.bf16.mxu0 %v549
    %686 = vmatpush1.bf16.msra.mxu0 %v548
    %687 = vmatprep.subr.bf16.mxu0 %v551
    %688 = vmatpush1.bf16.msra.mxu0 %v550
    %689 = vmatprep.subr.bf16.mxu0 %v553
    %690 = vmatpush1.bf16.msra.mxu0 %v552
    %691 = vmatprep.subr.bf16.mxu0 %v555
    %692 = vmatpush1.bf16.msra.mxu0 %v554
    %693 = vmatprep.subr.bf16.mxu0 %v557
    %694 = vmatpush1.bf16.msra.mxu0 %v556
    %695 = vmatprep.mubr.bf16.mxu0 %v225
    %696 = vmatmul.mubr.bf16.gmra.mrb[0].mxu0 %v224
    %v697 = vpop.f32.mrb[0].mxu0
    %v698 = vadd.f32 %v657, %v697
    %v699 = vpop.f32.mrb[0].mxu0
    %v700 = vadd.f32 %v659, %v699
    %v701 = vpop.f32.mrb[0].mxu0
    %v702 = vpop.f32.mrb[0].mxu0
    %703 = vdwg.mxu0
    %vm704 = vcmp.gt.f32.partialorder %v698, 0.0
    %vm705 = vcmp.gt.f32.partialorder %v700, 0.0
    %v706 = vmul.f32 %v698, 0.01
    %v707 = vmul.f32 %v700, 0.01
    %v708 = vsel %vm704, %v698, %v706
    %v709 = vsel %vm705, %v700, %v707
    %v710 = vld [vmem:[%s5] sm:$0x3]
    %v712 = vlaneseq
    %v713 = vshrl.u32 %v712, 7
    %v714 = vsub.s32 0, %v713
    %v715 = vrot.slane %v710, %v714
    %v716 = vlaneseq
    %v717 = vshrl.u32 %v716, 7
    %v718 = vsub.s32 1, %v717
    %v719 = vrot.slane %v710, %v718
    %v722 = vmul.f32 %v708, %v715
    %v723 = vmul.f32 %v709, %v719
    %v724 = vadd.f32 %v722, %v723
    %725 = vadd.xlane.f32.xlu0 %v724
    %v726 = vpop.xlane.xlu0 %725
    %v727 = vld [vmem:[#allocation2] sm:$0x1]
    %v729 = vlaneseq
    %v730 = vshrl.u32 %v729, 7
    %v731 = vsub.s32 0, %v730
    %v732 = vrot.slane %v727, %v731
    %v734 = vadd.f32 %v726, %v732
    %vm735 = vcmp.gt.f32.partialorder %v734, 0.0
    %v736 = vmul.f32 %v734, 0.01
    %v737 = vsel %vm735, %v734, %v736
    %vm738 = vcmask 7168
    %739 = vst.msk [vmem:[%s7] sm:$0xff] %vm738, %v737
    // Predicated region
    $region42: #{tpu_custom_call.1} parent=1 // pred_check
      _
    $region43: #{tpu_custom_call.1} parent=1 // pred_check_branch
      %741 = sbr.rel (0) target = $region45
    $region44: #{tpu_custom_call.1} parent=1 // pred_region
      _
    $region45: #{tpu_custom_call.1} parent=1 // pred_fallthru
      _
    // Predicated region
    $region46: #{tpu_custom_call.1} parent=1 // pred_check
      _
    $region47: #{tpu_custom_call.1} parent=1 // pred_check_branch
      %743 = sbr.rel (0) target = $region49
    $region48: #{tpu_custom_call.1} parent=1 // pred_region
      _
    $region49: #{tpu_custom_call.1} parent=1 // pred_fallthru
      _
    %744 = vsyncpa [#allocation4], 1
    %745 = vsyncpa [#allocation6], 1

</llo_original>
